<compile_context>
chip_gen: v7x
topology: tpu7x:2x2x1
jax: 0.10.0
libtpu: 0.0.40
codegen_flags: <defaults>
</compile_context>

<pallas_src>
import numpy as np
import jax
import jax.numpy as jnp
from jax import lax
from jax.experimental import pallas as pl
from jax.experimental.pallas import tpu as pltpu

B, S, C = 2, 8, 32      # graphs, max nodes per graph, hidden channels
NH = 4                  # attention heads
DH = C // NH            # head dim
FFN = 2 * C             # FFN hidden dim
N_FLAT = B * S          # flattened node count of the dense batch
NEG = -1e30             # effective -inf for the additive attention mask

W_LANES = 256           # packed weight lane width (7*C = 224, padded to 256)
W_ROWS = C + FFN        # packed weight rows (Wc..Wo,W1 rows + W2 rows)
OUT_LANES = 128         # lane-dense output width (C = 32 padded to 128)


def gps_kernel(x_ref, am_ref, w_ref, b_ref, out_ref):
    x = x_ref[...]                                   # [16, 32]  flat node features (f32)
    am = am_ref[...]                                 # [32, 16]  rows 0-15: adj_bd, 16-31: attn mask
    wb = w_ref[...].astype(jnp.bfloat16)             # [96, 256] packed weights (bf16 for 1-pass MXU)
    b = b_ref[...]                                   # [8, 128]  packed biases (f32)

    adj_bd = am[:N_FLAT, :].astype(jnp.bfloat16)     # [16,16] block-diag GCN-normalized adjacency
    attn_mask = am[N_FLAT:, :]                       # [16,16] additive mask (0 valid / NEG masked)

    x_bf = x.astype(jnp.bfloat16)

    # ---- fused [Wc | Wq*s | Wk | Wv] projection: one K=32 push, 128-lane output ----
    proj = jnp.dot(x_bf, wb[:C, :4 * C],
                   preferred_element_type=jnp.float32) + b[0:1, :]   # bias row0 = [0|bq|bk|bv]
    xc = proj[:, 0:C]                                # conv projection (bc added after aggregation)
    q = proj[:, C:2 * C].astype(jnp.bfloat16)        # 1/sqrt(DH) folded into Wq/bq host-side
    k = proj[:, 2 * C:3 * C].astype(jnp.bfloat16)
    v = proj[:, 3 * C:4 * C].astype(jnp.bfloat16)

    # ---- graph conv on the flat slab: block-diagonal A_hat @ (x Wc) -------------
    agg = jnp.dot(adj_bd, xc.astype(jnp.bfloat16), preferred_element_type=jnp.float32)

    # ---- flattened multi-head self-attention (block-diag + key-pad additive mask) ----
    heads = []
    for h in range(NH):                              # static unrolled, NH = 4
        sl = slice(h * DH, (h + 1) * DH)
        s = lax.dot_general(q[:, sl], k[:, sl], (((1,), (1,)), ((), ())),
                            preferred_element_type=jnp.float32)       # [16,16] NT matmul
        s = s + attn_mask
        s = s - jnp.max(s, axis=-1, keepdims=True)
        p = jnp.exp(s)
        d = jnp.sum(p, axis=-1, keepdims=True)
        r = pl.reciprocal(d, approx=True)
        r = r * (2.0 - d * r)                        # one Newton-Raphson step -> ~exact 1/d
        p = (p * r).astype(jnp.bfloat16)
        heads.append(jnp.dot(p, v[:, sl], preferred_element_type=jnp.float32))  # [16, DH]
    ctx = jnp.concatenate(heads, axis=-1).astype(jnp.bfloat16)        # [16, 32] one lane concat
    attn_out = jnp.dot(ctx, wb[:C, 6 * C:7 * C],                      # Wo at lanes 192:224
                       preferred_element_type=jnp.float32)

    # ---- combine residual branches: (agg + bc + x) + (attn + bo + x) -------------
    h = agg + attn_out + 2.0 * x + b[1:2, :C]        # bias row1 = bc + bo; norm=None -> identity

    # ---- 2-layer FFN (Linear -> ReLU -> Linear) + residual -----------------------
    h1 = jnp.dot(h.astype(jnp.bfloat16), wb[:C, 4 * C:6 * C],         # W1 at lanes 128:192
                 preferred_element_type=jnp.float32) + b[2:3, :FFN]
    h1 = jnp.maximum(h1, 0.0).astype(jnp.bfloat16)
    h2 = jnp.dot(h1, wb[C:C + FFN, :C],                               # W2 rows 32:96
                 preferred_element_type=jnp.float32) + b[3:4, :C]

    out = h2 + x                                     # ffn residual, [16, 32]
    # lane-dense store: pad channels to 128 lanes -> unmasked full-lane stores.
    out_ref[...] = jnp.concatenate(
        [out, jnp.zeros((N_FLAT, OUT_LANES - C), jnp.float32)], axis=-1)
    # NOTE: fully padded query rows see only their graph's valid keys -> garbage in
    # those dense rows; harmless because the caller gathers only mask-valid nodes.


def gps_block(x_flat, ampack, wfull, bfull):
    """x_flat [B*S,C], ampack [2*B*S,B*S], wfull [C+FFN,256], bfull [8,128] -> [B,S,C]."""
    out = pl.pallas_call(
        gps_kernel,
        out_shape=jax.ShapeDtypeStruct((N_FLAT, OUT_LANES), jnp.float32),
        in_specs=[pl.BlockSpec(memory_space=pltpu.MemorySpace.VMEM)] * 4,
        out_specs=pl.BlockSpec(memory_space=pltpu.MemorySpace.VMEM),
    )(x_flat, ampack, wfull, bfull)
    return out[:, :C].reshape(B, S, C)


def _ref_one(x, adj, mask, wc, bc, wq, bq, wk, bk, wv, bv, wo, bo, w1, b1, w2, b2):
    """Plain-JAX f32 reference for a single graph (unpacked weights, exact softmax)."""
    h_mpnn = adj @ x @ wc + bc + x
    q = x @ wq + bq
    k = x @ wk + bk
    v = x @ wv + bv
    scale = 1.0 / (DH ** 0.5)
    outs = []
    for h in range(NH):
        sl = slice(h * DH, (h + 1) * DH)
        s = (q[:, sl] @ k[:, sl].T) * scale
        s = jnp.where(mask > 0.5, s, NEG)
        p = jax.nn.softmax(s, axis=-1)
        outs.append(p @ v[:, sl])
    h_attn = jnp.concatenate(outs, axis=-1) @ wo + bo + x
    h = h_mpnn + h_attn
    h = jnp.maximum(h @ w1 + b1, 0.0) @ w2 + b2 + x
    return h


if __name__ == "__main__":
    # ---- deterministic inputs / parameters -------------------------------
    key = jax.random.PRNGKey(0)
    keys = jax.random.split(key, 16)

    n_nodes = [8, 6]                       # nodes per graph (graph 1 is padded)
    mask_bool = np.zeros((B, S), bool)
    for bi, n in enumerate(n_nodes):
        mask_bool[bi, :n] = True
    mask_f = jnp.asarray(mask_bool.astype(np.float32)).reshape(B, 1, S)   # reference only

    # chain graph per batch element, GCN-normalized A_hat = D^-1/2 (A+I) D^-1/2
    adj_np = np.zeros((B, S, S), np.float32)
    for bi, n in enumerate(n_nodes):
        A = np.zeros((S, S), np.float32)
        for i in range(n):
            A[i, i] = 1.0
            if i + 1 < n:
                A[i, i + 1] = 1.0
                A[i + 1, i] = 1.0
        deg = A.sum(axis=1)
        dinv = np.where(deg > 0, 1.0 / np.sqrt(np.maximum(deg, 1e-12)), 0.0)
        adj_np[bi] = dinv[:, None] * A * dinv[None, :]
    adj = jnp.asarray(adj_np)

    x_dense = jax.random.normal(keys[0], (B, S, C), jnp.float32)
    x_dense = x_dense * jnp.asarray(mask_bool.astype(np.float32))[:, :, None]
    x_flat = x_dense.reshape(N_FLAT, C)

    def w(kk, shape, sc=0.1):
        return jax.random.normal(kk, shape, jnp.float32) * sc

    wc, bc = w(keys[1], (C, C)), w(keys[2], (1, C), 0.01)        # graph conv
    wq, bq = w(keys[3], (C, C)), w(keys[4], (1, C), 0.01)
    wk, bk = w(keys[5], (C, C)), w(keys[6], (1, C), 0.01)
    wv, bv = w(keys[7], (C, C)), w(keys[8], (1, C), 0.01)
    wo, bo = w(keys[9], (C, C)), w(keys[10], (1, C), 0.01)
    w1, b1 = w(keys[11], (C, FFN)), w(keys[12], (1, FFN), 0.01)  # FFN layer 1
    w2, b2 = w(keys[13], (FFN, C)), w(keys[14], (1, C), 0.01)    # FFN layer 2

    # ---- host-side packing ------------------------------------------------
    scale = 1.0 / float(np.sqrt(DH))

    # weights: [C, 256] = [Wc | Wq*s | Wk | Wv | W1 | Wo | pad], then W2 (lane-padded) rows
    wtop = jnp.concatenate(
        [wc, wq * scale, wk, wv, w1, wo,
         jnp.zeros((C, W_LANES - 7 * C), jnp.float32)], axis=1)              # [32, 256]
    w2pad = jnp.concatenate([w2, jnp.zeros((FFN, W_LANES - C), jnp.float32)], axis=1)  # [64, 256]
    wfull = jnp.concatenate([wtop, w2pad], axis=0)                            # [96, 256]

    # biases: [8, 128] sublane-row table
    zC = jnp.zeros((1, C), jnp.float32)
    row0 = jnp.concatenate([zC, bq * scale, bk, bv], axis=1)                  # added to fused proj
    row1 = jnp.concatenate([bc + bo, zC, zC, zC], axis=1)                     # conv + attn out biases
    row2 = jnp.concatenate([b1, zC, zC], axis=1)                              # FFN-1 bias (64 lanes)
    row3 = jnp.concatenate([b2, zC, zC, zC], axis=1)                          # FFN-2 bias
    bfull = jnp.concatenate([row0, row1, row2, row3,
                             jnp.zeros((4, 128), jnp.float32)], axis=0)       # [8, 128]

    # block-diagonal adjacency + combined additive attention mask, one tensor [32, 16]
    adj_bd_np = np.zeros((N_FLAT, N_FLAT), np.float32)
    for bi in range(B):
        adj_bd_np[bi * S:(bi + 1) * S, bi * S:(bi + 1) * S] = adj_np[bi]
    graph_id = np.repeat(np.arange(B), S)
    valid = mask_bool.reshape(-1)
    same_graph = graph_id[:, None] == graph_id[None, :]
    amask_np = np.where(same_graph & valid[None, :], 0.0, NEG).astype(np.float32)
    ampack = jnp.asarray(np.concatenate([adj_bd_np, amask_np], axis=0))       # [32, 16]

    # ---- run Pallas kernel ------------------------------------------------
    dense_out = gps_block(x_flat, ampack, wfull, bfull)
    dense_out = jax.block_until_ready(dense_out)

    # ---- check against plain-JAX f32 reference on valid (unpadded) nodes --
    ref_dense = jax.vmap(_ref_one, in_axes=(0, 0, 0) + (None,) * 14)(
        x_dense, adj, mask_f, wc, bc, wq, bq, wk, bk, wv, bv, wo, bo, w1, b1, w2, b2)
    out_nodes = np.asarray(dense_out)[mask_bool]   # [N, C] == updated batch.x
    ref_nodes = np.asarray(ref_dense)[mask_bool]
    err = float(np.max(np.abs(out_nodes - ref_nodes)))
    # tolerance reflects bf16 matmul operands (per perf review; f32 accumulation,
    # softmax reciprocal is Newton-refined so effectively exact).  Genuine bugs
    # (wrong slice/mask) produce errors orders of magnitude above this.
    assert err < 5e-2, f"mismatch vs reference: {err}"

    # TODO(synk): dropout>0 / PyG norm layers not exercised (dropout=0.0, norm=None here).
    print("KERNEL_OK")
</pallas_src>

<mosaic_0001>
module attributes {stable_mosaic.version = 11 : i64} {
  func.func @gps_kernel(%arg0: memref<16x32xf32, #tpu.memory_space<vmem>>, %arg1: memref<32x16xf32, #tpu.memory_space<vmem>>, %arg2: memref<96x256xf32, #tpu.memory_space<vmem>>, %arg3: memref<8x128xf32, #tpu.memory_space<vmem>>, %arg4: memref<16x128xf32, #tpu.memory_space<vmem>>) attributes {dimension_semantics = [], scalar_prefetch = 0 : i64, scratch_operands = 0 : i64, tpu.core_type = #tpu.core_type<tc>} {
    %c0 = arith.constant 0 : index
    %c0_0 = arith.constant 0 : index
    %0 = vector.load %arg0[%c0, %c0_0] : memref<16x32xf32, #tpu.memory_space<vmem>>, vector<16x32xf32>
    %c0_1 = arith.constant 0 : index
    %c0_2 = arith.constant 0 : index
    %1 = vector.load %arg1[%c0_1, %c0_2] : memref<32x16xf32, #tpu.memory_space<vmem>>, vector<32x16xf32>
    %c0_3 = arith.constant 0 : index
    %c0_4 = arith.constant 0 : index
    %2 = vector.load %arg2[%c0_3, %c0_4] : memref<96x256xf32, #tpu.memory_space<vmem>>, vector<96x256xf32>
    %3 = arith.truncf %2 : vector<96x256xf32> to vector<96x256xbf16>
    %c0_5 = arith.constant 0 : index
    %c0_6 = arith.constant 0 : index
    %4 = vector.load %arg3[%c0_5, %c0_6] : memref<8x128xf32, #tpu.memory_space<vmem>>, vector<8x128xf32>
    %5 = vector.extract_strided_slice %1 {offsets = [0, 0], sizes = [16, 16], strides = [1, 1]} : vector<32x16xf32> to vector<16x16xf32>
    %6 = arith.truncf %5 : vector<16x16xf32> to vector<16x16xbf16>
    %7 = vector.extract_strided_slice %1 {offsets = [16, 0], sizes = [16, 16], strides = [1, 1]} : vector<32x16xf32> to vector<16x16xf32>
    %8 = arith.truncf %0 : vector<16x32xf32> to vector<16x32xbf16>
    %9 = vector.extract_strided_slice %3 {offsets = [0, 0], sizes = [32, 128], strides = [1, 1]} : vector<96x256xbf16> to vector<32x128xbf16>
    %cst = arith.constant dense<0.000000e+00> : vector<16x128xf32>
    %10 = tpu.matmul %8, %9, %cst {dimension_numbers = #tpu.dot_dimension_numbers<[1], [0], [0], [1], [0, 0, 1, 1], [], []>} : vector<16x32xbf16>, vector<32x128xbf16>, vector<16x128xf32> -> vector<16x128xf32>
    %11 = vector.extract_strided_slice %4 {offsets = [0, 0], sizes = [1, 128], strides = [1, 1]} : vector<8x128xf32> to vector<1x128xf32>
    %12 = vector.broadcast %11 : vector<1x128xf32> to vector<16x128xf32>
    %13 = arith.addf %10, %12 : vector<16x128xf32>
    %14 = vector.extract_strided_slice %13 {offsets = [0, 0], sizes = [16, 32], strides = [1, 1]} : vector<16x128xf32> to vector<16x32xf32>
    %15 = vector.extract_strided_slice %13 {offsets = [0, 32], sizes = [16, 32], strides = [1, 1]} : vector<16x128xf32> to vector<16x32xf32>
    %16 = arith.truncf %15 : vector<16x32xf32> to vector<16x32xbf16>
    %17 = vector.extract_strided_slice %13 {offsets = [0, 64], sizes = [16, 32], strides = [1, 1]} : vector<16x128xf32> to vector<16x32xf32>
    %18 = arith.truncf %17 : vector<16x32xf32> to vector<16x32xbf16>
    %19 = vector.extract_strided_slice %13 {offsets = [0, 96], sizes = [16, 32], strides = [1, 1]} : vector<16x128xf32> to vector<16x32xf32>
    %20 = arith.truncf %19 : vector<16x32xf32> to vector<16x32xbf16>
    %21 = arith.truncf %14 : vector<16x32xf32> to vector<16x32xbf16>
    %cst_7 = arith.constant dense<0.000000e+00> : vector<16x32xf32>
    %22 = tpu.matmul %6, %21, %cst_7 {dimension_numbers = #tpu.dot_dimension_numbers<[1], [0], [0], [1], [0, 0, 1, 1], [], []>} : vector<16x16xbf16>, vector<16x32xbf16>, vector<16x32xf32> -> vector<16x32xf32>
    %23 = vector.extract_strided_slice %16 {offsets = [0, 0], sizes = [16, 8], strides = [1, 1]} : vector<16x32xbf16> to vector<16x8xbf16>
    %24 = vector.extract_strided_slice %18 {offsets = [0, 0], sizes = [16, 8], strides = [1, 1]} : vector<16x32xbf16> to vector<16x8xbf16>
    %cst_8 = arith.constant dense<0.000000e+00> : vector<16x16xf32>
    %25 = tpu.matmul %23, %24, %cst_8 {dimension_numbers = #tpu.dot_dimension_numbers<[1], [1], [0], [0], [0, 0, 1, 0], [], []>} : vector<16x8xbf16>, vector<16x8xbf16>, vector<16x16xf32> -> vector<16x16xf32>
    %26 = arith.addf %25, %7 : vector<16x16xf32>
    %cst_9 = arith.constant dense<0xFF800000> : vector<16xf32>
    %27 = vector.multi_reduction <maximumf>, %26, %cst_9 [1] : vector<16x16xf32> to vector<16xf32>
    %28 = vector.shape_cast %27 : vector<16xf32> to vector<16x1xf32>
    %29 = vector.broadcast %28 : vector<16x1xf32> to vector<16x16xf32>
    %30 = arith.subf %26, %29 : vector<16x16xf32>
    %31 = math.exp %30 : vector<16x16xf32>
    %cst_10 = arith.constant dense<0.000000e+00> : vector<16xf32>
    %32 = vector.multi_reduction <add>, %31, %cst_10 [1] : vector<16x16xf32> to vector<16xf32>
    %33 = vector.shape_cast %32 : vector<16xf32> to vector<16x1xf32>
    %34 = tpu.reciprocal %33 {approx = true} : vector<16x1xf32> -> vector<16x1xf32>
    %35 = arith.mulf %33, %34 : vector<16x1xf32>
    %cst_11 = arith.constant 2.000000e+00 : f32
    %36 = vector.broadcast %cst_11 : f32 to vector<16x1xf32>
    %37 = arith.subf %36, %35 : vector<16x1xf32>
    %38 = arith.mulf %34, %37 : vector<16x1xf32>
    %39 = vector.broadcast %38 : vector<16x1xf32> to vector<16x16xf32>
    %40 = arith.mulf %31, %39 : vector<16x16xf32>
    %41 = arith.truncf %40 : vector<16x16xf32> to vector<16x16xbf16>
    %42 = vector.extract_strided_slice %20 {offsets = [0, 0], sizes = [16, 8], strides = [1, 1]} : vector<16x32xbf16> to vector<16x8xbf16>
    %cst_12 = arith.constant dense<0.000000e+00> : vector<16x8xf32>
    %43 = tpu.matmul %41, %42, %cst_12 {dimension_numbers = #tpu.dot_dimension_numbers<[1], [0], [0], [1], [0, 0, 1, 1], [], []>} : vector<16x16xbf16>, vector<16x8xbf16>, vector<16x8xf32> -> vector<16x8xf32>
    %44 = vector.extract_strided_slice %16 {offsets = [0, 8], sizes = [16, 8], strides = [1, 1]} : vector<16x32xbf16> to vector<16x8xbf16>
    %45 = vector.extract_strided_slice %18 {offsets = [0, 8], sizes = [16, 8], strides = [1, 1]} : vector<16x32xbf16> to vector<16x8xbf16>
    %cst_13 = arith.constant dense<0.000000e+00> : vector<16x16xf32>
    %46 = tpu.matmul %44, %45, %cst_13 {dimension_numbers = #tpu.dot_dimension_numbers<[1], [1], [0], [0], [0, 0, 1, 0], [], []>} : vector<16x8xbf16>, vector<16x8xbf16>, vector<16x16xf32> -> vector<16x16xf32>
    %47 = arith.addf %46, %7 : vector<16x16xf32>
    %cst_14 = arith.constant dense<0xFF800000> : vector<16xf32>
    %48 = vector.multi_reduction <maximumf>, %47, %cst_14 [1] : vector<16x16xf32> to vector<16xf32>
    %49 = vector.shape_cast %48 : vector<16xf32> to vector<16x1xf32>
    %50 = vector.broadcast %49 : vector<16x1xf32> to vector<16x16xf32>
    %51 = arith.subf %47, %50 : vector<16x16xf32>
    %52 = math.exp %51 : vector<16x16xf32>
    %cst_15 = arith.constant dense<0.000000e+00> : vector<16xf32>
    %53 = vector.multi_reduction <add>, %52, %cst_15 [1] : vector<16x16xf32> to vector<16xf32>
    %54 = vector.shape_cast %53 : vector<16xf32> to vector<16x1xf32>
    %55 = tpu.reciprocal %54 {approx = true} : vector<16x1xf32> -> vector<16x1xf32>
    %56 = arith.mulf %54, %55 : vector<16x1xf32>
    %cst_16 = arith.constant 2.000000e+00 : f32
    %57 = vector.broadcast %cst_16 : f32 to vector<16x1xf32>
    %58 = arith.subf %57, %56 : vector<16x1xf32>
    %59 = arith.mulf %55, %58 : vector<16x1xf32>
    %60 = vector.broadcast %59 : vector<16x1xf32> to vector<16x16xf32>
    %61 = arith.mulf %52, %60 : vector<16x16xf32>
    %62 = arith.truncf %61 : vector<16x16xf32> to vector<16x16xbf16>
    %63 = vector.extract_strided_slice %20 {offsets = [0, 8], sizes = [16, 8], strides = [1, 1]} : vector<16x32xbf16> to vector<16x8xbf16>
    %cst_17 = arith.constant dense<0.000000e+00> : vector<16x8xf32>
    %64 = tpu.matmul %62, %63, %cst_17 {dimension_numbers = #tpu.dot_dimension_numbers<[1], [0], [0], [1], [0, 0, 1, 1], [], []>} : vector<16x16xbf16>, vector<16x8xbf16>, vector<16x8xf32> -> vector<16x8xf32>
    %65 = vector.extract_strided_slice %16 {offsets = [0, 16], sizes = [16, 8], strides = [1, 1]} : vector<16x32xbf16> to vector<16x8xbf16>
    %66 = vector.extract_strided_slice %18 {offsets = [0, 16], sizes = [16, 8], strides = [1, 1]} : vector<16x32xbf16> to vector<16x8xbf16>
    %cst_18 = arith.constant dense<0.000000e+00> : vector<16x16xf32>
    %67 = tpu.matmul %65, %66, %cst_18 {dimension_numbers = #tpu.dot_dimension_numbers<[1], [1], [0], [0], [0, 0, 1, 0], [], []>} : vector<16x8xbf16>, vector<16x8xbf16>, vector<16x16xf32> -> vector<16x16xf32>
    %68 = arith.addf %67, %7 : vector<16x16xf32>
    %cst_19 = arith.constant dense<0xFF800000> : vector<16xf32>
    %69 = vector.multi_reduction <maximumf>, %68, %cst_19 [1] : vector<16x16xf32> to vector<16xf32>
    %70 = vector.shape_cast %69 : vector<16xf32> to vector<16x1xf32>
    %71 = vector.broadcast %70 : vector<16x1xf32> to vector<16x16xf32>
    %72 = arith.subf %68, %71 : vector<16x16xf32>
    %73 = math.exp %72 : vector<16x16xf32>
    %cst_20 = arith.constant dense<0.000000e+00> : vector<16xf32>
    %74 = vector.multi_reduction <add>, %73, %cst_20 [1] : vector<16x16xf32> to vector<16xf32>
    %75 = vector.shape_cast %74 : vector<16xf32> to vector<16x1xf32>
    %76 = tpu.reciprocal %75 {approx = true} : vector<16x1xf32> -> vector<16x1xf32>
    %77 = arith.mulf %75, %76 : vector<16x1xf32>
    %cst_21 = arith.constant 2.000000e+00 : f32
    %78 = vector.broadcast %cst_21 : f32 to vector<16x1xf32>
    %79 = arith.subf %78, %77 : vector<16x1xf32>
    %80 = arith.mulf %76, %79 : vector<16x1xf32>
    %81 = vector.broadcast %80 : vector<16x1xf32> to vector<16x16xf32>
    %82 = arith.mulf %73, %81 : vector<16x16xf32>
    %83 = arith.truncf %82 : vector<16x16xf32> to vector<16x16xbf16>
    %84 = vector.extract_strided_slice %20 {offsets = [0, 16], sizes = [16, 8], strides = [1, 1]} : vector<16x32xbf16> to vector<16x8xbf16>
    %cst_22 = arith.constant dense<0.000000e+00> : vector<16x8xf32>
    %85 = tpu.matmul %83, %84, %cst_22 {dimension_numbers = #tpu.dot_dimension_numbers<[1], [0], [0], [1], [0, 0, 1, 1], [], []>} : vector<16x16xbf16>, vector<16x8xbf16>, vector<16x8xf32> -> vector<16x8xf32>
    %86 = vector.extract_strided_slice %16 {offsets = [0, 24], sizes = [16, 8], strides = [1, 1]} : vector<16x32xbf16> to vector<16x8xbf16>
    %87 = vector.extract_strided_slice %18 {offsets = [0, 24], sizes = [16, 8], strides = [1, 1]} : vector<16x32xbf16> to vector<16x8xbf16>
    %cst_23 = arith.constant dense<0.000000e+00> : vector<16x16xf32>
    %88 = tpu.matmul %86, %87, %cst_23 {dimension_numbers = #tpu.dot_dimension_numbers<[1], [1], [0], [0], [0, 0, 1, 0], [], []>} : vector<16x8xbf16>, vector<16x8xbf16>, vector<16x16xf32> -> vector<16x16xf32>
    %89 = arith.addf %88, %7 : vector<16x16xf32>
    %cst_24 = arith.constant dense<0xFF800000> : vector<16xf32>
    %90 = vector.multi_reduction <maximumf>, %89, %cst_24 [1] : vector<16x16xf32> to vector<16xf32>
    %91 = vector.shape_cast %90 : vector<16xf32> to vector<16x1xf32>
    %92 = vector.broadcast %91 : vector<16x1xf32> to vector<16x16xf32>
    %93 = arith.subf %89, %92 : vector<16x16xf32>
    %94 = math.exp %93 : vector<16x16xf32>
    %cst_25 = arith.constant dense<0.000000e+00> : vector<16xf32>
    %95 = vector.multi_reduction <add>, %94, %cst_25 [1] : vector<16x16xf32> to vector<16xf32>
    %96 = vector.shape_cast %95 : vector<16xf32> to vector<16x1xf32>
    %97 = tpu.reciprocal %96 {approx = true} : vector<16x1xf32> -> vector<16x1xf32>
    %98 = arith.mulf %96, %97 : vector<16x1xf32>
    %cst_26 = arith.constant 2.000000e+00 : f32
    %99 = vector.broadcast %cst_26 : f32 to vector<16x1xf32>
    %100 = arith.subf %99, %98 : vector<16x1xf32>
    %101 = arith.mulf %97, %100 : vector<16x1xf32>
    %102 = vector.broadcast %101 : vector<16x1xf32> to vector<16x16xf32>
    %103 = arith.mulf %94, %102 : vector<16x16xf32>
    %104 = arith.truncf %103 : vector<16x16xf32> to vector<16x16xbf16>
    %105 = vector.extract_strided_slice %20 {offsets = [0, 24], sizes = [16, 8], strides = [1, 1]} : vector<16x32xbf16> to vector<16x8xbf16>
    %cst_27 = arith.constant dense<0.000000e+00> : vector<16x8xf32>
    %106 = tpu.matmul %104, %105, %cst_27 {dimension_numbers = #tpu.dot_dimension_numbers<[1], [0], [0], [1], [0, 0, 1, 1], [], []>} : vector<16x16xbf16>, vector<16x8xbf16>, vector<16x8xf32> -> vector<16x8xf32>
    %107 = tpu.concatenate %43, %64, %85, %106 in 1 : vector<16x8xf32>, vector<16x8xf32>, vector<16x8xf32>, vector<16x8xf32> -> vector<16x32xf32>
    %108 = arith.truncf %107 : vector<16x32xf32> to vector<16x32xbf16>
    %109 = vector.extract_strided_slice %3 {offsets = [0, 192], sizes = [32, 32], strides = [1, 1]} : vector<96x256xbf16> to vector<32x32xbf16>
    %cst_28 = arith.constant dense<0.000000e+00> : vector<16x32xf32>
    %110 = tpu.matmul %108, %109, %cst_28 {dimension_numbers = #tpu.dot_dimension_numbers<[1], [0], [0], [1], [0, 0, 1, 1], [], []>} : vector<16x32xbf16>, vector<32x32xbf16>, vector<16x32xf32> -> vector<16x32xf32>
    %111 = arith.addf %22, %110 : vector<16x32xf32>
    %cst_29 = arith.constant 2.000000e+00 : f32
    %112 = vector.broadcast %cst_29 : f32 to vector<16x32xf32>
    %113 = arith.mulf %112, %0 : vector<16x32xf32>
    %114 = arith.addf %111, %113 : vector<16x32xf32>
    %115 = vector.extract_strided_slice %4 {offsets = [1, 0], sizes = [1, 32], strides = [1, 1]} : vector<8x128xf32> to vector<1x32xf32>
    %116 = vector.broadcast %115 : vector<1x32xf32> to vector<16x32xf32>
    %117 = arith.addf %114, %116 : vector<16x32xf32>
    %118 = arith.truncf %117 : vector<16x32xf32> to vector<16x32xbf16>
    %119 = vector.extract_strided_slice %3 {offsets = [0, 128], sizes = [32, 64], strides = [1, 1]} : vector<96x256xbf16> to vector<32x64xbf16>
    %cst_30 = arith.constant dense<0.000000e+00> : vector<16x64xf32>
    %120 = tpu.matmul %118, %119, %cst_30 {dimension_numbers = #tpu.dot_dimension_numbers<[1], [0], [0], [1], [0, 0, 1, 1], [], []>} : vector<16x32xbf16>, vector<32x64xbf16>, vector<16x64xf32> -> vector<16x64xf32>
    %121 = vector.extract_strided_slice %4 {offsets = [2, 0], sizes = [1, 64], strides = [1, 1]} : vector<8x128xf32> to vector<1x64xf32>
    %122 = vector.broadcast %121 : vector<1x64xf32> to vector<16x64xf32>
    %123 = arith.addf %120, %122 : vector<16x64xf32>
    %cst_31 = arith.constant 0.000000e+00 : f32
    %124 = vector.broadcast %cst_31 : f32 to vector<16x64xf32>
    %125 = arith.maximumf %123, %124 : vector<16x64xf32>
    %126 = arith.truncf %125 : vector<16x64xf32> to vector<16x64xbf16>
    %127 = vector.extract_strided_slice %3 {offsets = [32, 0], sizes = [64, 32], strides = [1, 1]} : vector<96x256xbf16> to vector<64x32xbf16>
    %cst_32 = arith.constant dense<0.000000e+00> : vector<16x32xf32>
    %128 = tpu.matmul %126, %127, %cst_32 {dimension_numbers = #tpu.dot_dimension_numbers<[1], [0], [0], [1], [0, 0, 1, 1], [], []>} : vector<16x64xbf16>, vector<64x32xbf16>, vector<16x32xf32> -> vector<16x32xf32>
    %129 = vector.extract_strided_slice %4 {offsets = [3, 0], sizes = [1, 32], strides = [1, 1]} : vector<8x128xf32> to vector<1x32xf32>
    %130 = vector.broadcast %129 : vector<1x32xf32> to vector<16x32xf32>
    %131 = arith.addf %128, %130 : vector<16x32xf32>
    %132 = arith.addf %131, %0 : vector<16x32xf32>
    %cst_33 = arith.constant 0.000000e+00 : f32
    %133 = vector.broadcast %cst_33 : f32 to vector<16x96xf32>
    %134 = tpu.concatenate %132, %133 in 1 : vector<16x32xf32>, vector<16x96xf32> -> vector<16x128xf32>
    %c0_34 = arith.constant 0 : index
    %c0_35 = arith.constant 0 : index
    %135 = vector.load %arg4[%c0_34, %c0_35] : memref<16x128xf32, #tpu.memory_space<vmem>>, vector<16x128xf32>
    tpu.vector_store %arg4[%c0_34, %c0_35], %134 {strides = array<i32>} : memref<16x128xf32, #tpu.memory_space<vmem>>, vector<16x128xf32>,
    return
  }
}

</mosaic_0001>

<llo_original>
// kernel: tpu_custom_call.1
$region0: #{tpu_custom_call.1}
  #allocation0 [shape = 'u32[]', space=smem, size = 0x4, offset = 0x4, fixed_abs, tag = 'smem constant byte address 0x4 - core index']
  #allocation1 [shape = 'u32[144,128]{1,0:T(1,128)}', space=vmem, size = 0x12000, scoped, tag = 'internal scratch']
  %s0 = inlined_call_operand.vmem [shape: f32[16,32], index: 0, kind: input, shape index: {}]
  %s1 = inlined_call_operand.vmem [shape: f32[32,16], index: 1, kind: input, shape index: {}]
  %s2 = inlined_call_operand.hbm [shape: f32[96,256], index: 2, kind: input, shape index: {}]
  %s3 = inlined_call_operand.vmem [shape: f32[8,128], index: 3, kind: input, shape index: {}]
  %s4 = inlined_call_operand.hbm [shape: f32[16,128], index: 4, kind: output, shape index: {}]
  %s5 = sld [smem:[#allocation0]]
  $region30: #{tpu_custom_call.1} parent=0
    _
  %s7 = ssub.s32 1, %s5
  %s8 = scalar_select 0, %s7, %s5
  $region1: #{tpu_custom_call.1} parent=0
    #allocation2 [shape = 'u8[98304]{0}', space=vmem, size = 0x18000, scoped, tag = 'input window, operand 2, single buffered']
    #allocation3 [shape = 's32[1]{0}', space=sflag, size = 0x4, scoped, tag = 'scoped memory for tpu_custom_call.1']
    #allocation4 [shape = 's32[1]{0}', space=sflag, size = 0x4, scoped, tag = 'scoped memory for tpu_custom_call.1']
    #allocation5 [shape = 'u8[8192]{0}', space=vmem, size = 0x2000, scoped, tag = 'output window, operand 0, single buffered']
    %9 = vsyncpa [#allocation3], 0
    %10 = vsyncpa [#allocation4], 0
    // Predicated region
    $region2: #{tpu_custom_call.1} parent=1 // pred_check
      _
    $region3: #{tpu_custom_call.1} parent=1 // pred_check_branch
      %12 = sbr.rel (0) target = $region5
    $region4: #{tpu_custom_call.1} parent=1 // pred_region
      _
    $region5: #{tpu_custom_call.1} parent=1 // pred_fallthru
      _
    // Predicated region
    $region6: #{tpu_custom_call.1} parent=1 // pred_check
      _
    $region7: #{tpu_custom_call.1} parent=1 // pred_check_branch
      %14 = sbr.rel (0) target = $region9
    $region8: #{tpu_custom_call.1} parent=1 // pred_region
      _
    $region9: #{tpu_custom_call.1} parent=1 // pred_fallthru
      _
    // Predicated region
    $region10: #{tpu_custom_call.1} parent=1 // pred_check
      _
    $region11: #{tpu_custom_call.1} parent=1 // pred_check_branch
      %16 = sbr.rel (0) target = $region13
    $region12: #{tpu_custom_call.1} parent=1 // pred_region
      %s18 = ssub.s32 3072, 3072
      %19 = vsyncadd [#allocation3], %s18
      %s20 = sshll.u32 [#allocation2], 4
      %s21 = int_to_ptr.vmem [resolvable:$true] %s20
      %26 = dma.hbm_to_vmem [thread:$0]  %s2, 3072, %s21, [#allocation3], 256, 256, 16
    $region13: #{tpu_custom_call.1} parent=1 // pred_fallthru
      _
    // Predicated region
    $region14: #{tpu_custom_call.1} parent=1 // pred_check
      _
    $region15: #{tpu_custom_call.1} parent=1 // pred_check_branch
      %28 = sbr.rel (0) target = $region17
    $region16: #{tpu_custom_call.1} parent=1 // pred_region
      _
    $region17: #{tpu_custom_call.1} parent=1 // pred_fallthru
      _
    // Predicated region
    $region18: #{tpu_custom_call.1} parent=1 // pred_check
      _
    $region19: #{tpu_custom_call.1} parent=1 // pred_check_branch
      %30 = sbr.rel (0) target = $region21
    $region20: #{tpu_custom_call.1} parent=1 // pred_region
      %31 = dma.done [#allocation3], 3072
    $region21: #{tpu_custom_call.1} parent=1 // pred_fallthru
      _
    %v33 = vld [vmem:[%s0] sm:$0xff]
    %v34 = vld [vmem:[%s0 + $0x8] sm:$0xff]
    %v35 = vld [vmem:[%s1] sm:$0xff]
    %v36 = vld [vmem:[%s1 + $0x8] sm:$0xff]
    %v37 = vld [vmem:[%s1 + $0x10] sm:$0xff]
    %v38 = vld [vmem:[%s1 + $0x18] sm:$0xff]
    %v39 = vld [vmem:[#allocation2] sm:$0xff]
    %v40 = vld [vmem:[#allocation2 + $0x8] sm:$0xff]
    %v41 = vld [vmem:[#allocation2 + $0x10] sm:$0xff]
    %v42 = vld [vmem:[#allocation2 + $0x18] sm:$0xff]
    %v43 = vld [vmem:[#allocation2 + $0x20] sm:$0xff]
    %v44 = vld [vmem:[#allocation2 + $0x28] sm:$0xff]
    %v45 = vld [vmem:[#allocation2 + $0x30] sm:$0xff]
    %v46 = vld [vmem:[#allocation2 + $0x38] sm:$0xff]
    %v47 = vld [vmem:[#allocation2 + $0x40] sm:$0xff]
    %v48 = vld [vmem:[#allocation2 + $0x50] sm:$0xff]
    %v49 = vld [vmem:[#allocation2 + $0x60] sm:$0xff]
    %v50 = vld [vmem:[#allocation2 + $0x70] sm:$0xff]
    %v51 = vld [vmem:[#allocation2 + $0x80] sm:$0xff]
    %v52 = vld [vmem:[#allocation2 + $0x90] sm:$0xff]
    %v53 = vld [vmem:[#allocation2 + $0xa0] sm:$0xff]
    %v54 = vld [vmem:[#allocation2 + $0xb0] sm:$0xff]
    %v55 = vpack.c.bf16 %v41, %v39
    %v56 = vpack.c.bf16 %v42, %v40
    %v57 = vpack.c.bf16 %v45, %v43
    %v58 = vpack.c.bf16 %v46, %v44
    %v59 = vpack.c.bf16 %v48, %v47
    %v60 = vpack.c.bf16 %v50, %v49
    %v61 = vpack.c.bf16 %v52, %v51
    %v62 = vpack.c.bf16 %v54, %v53
    %v63 = vld [vmem:[%s3] sm:$0xff]
    %v64 = vpack.c.bf16 %v36, %v35
    %v65 = vpack.c.bf16 %v34, %v33
    %v66 = vlaneseq
    %v67 = vshrl.u32 %v66, 7
    %v68 = vsub.s32 0, %v67
    %v69 = vrot.slane %v63, %v68
    %vm70 = vcmask 261120
    %v72 = vsel %vm70, %v65, 0
    %74 = vmatprep.subr.bf16.mxu0 0
    %75 = vmatpush1.bf16.msra.mxu0 %v55
    %76 = vmatprep.subr.bf16.mxu0 0
    %77 = vmatpush1.bf16.msra.mxu0 %v57
    %78 = vmatprep.subr.bf16.mxu0 0
    %79 = vmatpush1.bf16.msra.mxu0 0
    %80 = vmatprep.subr.bf16.mxu0 0
    %81 = vmatpush1.bf16.msra.mxu0 0
    %82 = vmatprep.subr.bf16.mxu0 0
    %83 = vmatpush1.bf16.msra.mxu0 0
    %84 = vmatprep.subr.bf16.mxu0 0
    %85 = vmatpush1.bf16.msra.mxu0 0
    %86 = vmatprep.subr.bf16.mxu0 0
    %87 = vmatpush1.bf16.msra.mxu0 0
    %88 = vmatprep.subr.bf16.mxu0 0
    %89 = vmatpush1.bf16.msra.mxu0 0
    %90 = vmatprep.subr.bf16.mxu0 0
    %91 = vmatpush1.bf16.msra.mxu0 0
    %92 = vmatprep.subr.bf16.mxu0 0
    %93 = vmatpush1.bf16.msra.mxu0 0
    %94 = vmatprep.subr.bf16.mxu0 0
    %95 = vmatpush1.bf16.msra.mxu0 0
    %96 = vmatprep.subr.bf16.mxu0 0
    %97 = vmatpush1.bf16.msra.mxu0 0
    %98 = vmatprep.subr.bf16.mxu0 0
    %99 = vmatpush1.bf16.msra.mxu0 0
    %100 = vmatprep.subr.bf16.mxu0 0
    %101 = vmatpush1.bf16.msra.mxu0 0
    %102 = vmatprep.subr.bf16.mxu0 0
    %103 = vmatpush1.bf16.msra.mxu0 0
    %104 = vmatprep.subr.bf16.mxu0 0
    %105 = vmatpush1.bf16.msra.mxu0 0
    %106 = vmatprep.mubr.bf16.mxu0 0
    %107 = vmatmul.mubr.bf16.gmra.mrb[0].mxu0 %v72
    %v108 = vpop.f32.mrb[0].mxu0
    %v109 = vadd.f32 %v69, %v108
    %v110 = vpop.f32.mrb[0].mxu0
    %v111 = vpop.f32.mrb[0].mxu0
    %v112 = vadd.f32 %v69, %v111
    %v113 = vpop.f32.mrb[0].mxu0
    %114 = vdwg.mxu0
    %v115 = vpack.c.bf16 %v112, %v109
    %117 = vrot.lane.b32.xlu0 %v115, 96
    %v118 = vpop.permute.xlu0 %117
    %119 = vrot.lane.b32.xlu0 %v115, 64
    %v120 = vpop.permute.xlu0 %119
    %vm121 = vcmask 64512
    %v123 = vsel %vm121, %v118, 0
    %v126 = vsel %vm121, %v120, 0
    %128 = vmatprep.subr.bf16.mxu0 0
    %129 = vmatpush1.bf16.xpose.msra.mxu0 %v126
    %130 = vmatprep.subr.bf16.mxu0 0
    %131 = vmatpush1.bf16.xpose.msra.mxu0 0
    %132 = vmatprep.subr.bf16.mxu0 0
    %133 = vmatpush1.bf16.xpose.msra.mxu0 0
    %134 = vmatprep.subr.bf16.mxu0 0
    %135 = vmatpush1.bf16.xpose.msra.mxu0 0
    %136 = vmatprep.subr.bf16.mxu0 0
    %137 = vmatpush1.bf16.xpose.msra.mxu0 0
    %138 = vmatprep.subr.bf16.mxu0 0
    %139 = vmatpush1.bf16.xpose.msra.mxu0 0
    %140 = vmatprep.subr.bf16.mxu0 0
    %141 = vmatpush1.bf16.xpose.msra.mxu0 0
    %142 = vmatprep.subr.bf16.mxu0 0
    %143 = vmatpush1.bf16.xpose.msra.mxu0 0
    %144 = vmatprep.subr.bf16.mxu0 0
    %145 = vmatpush1.bf16.xpose.msra.mxu0 0
    %146 = vmatprep.subr.bf16.mxu0 0
    %147 = vmatpush1.bf16.xpose.msra.mxu0 0
    %148 = vmatprep.subr.bf16.mxu0 0
    %149 = vmatpush1.bf16.xpose.msra.mxu0 0
    %150 = vmatprep.subr.bf16.mxu0 0
    %151 = vmatpush1.bf16.xpose.msra.mxu0 0
    %152 = vmatprep.subr.bf16.mxu0 0
    %153 = vmatpush1.bf16.xpose.msra.mxu0 0
    %154 = vmatprep.subr.bf16.mxu0 0
    %155 = vmatpush1.bf16.xpose.msra.mxu0 0
    %156 = vmatprep.subr.bf16.mxu0 0
    %157 = vmatpush1.bf16.xpose.msra.mxu0 0
    %158 = vmatprep.subr.bf16.mxu0 0
    %159 = vmatpush1.bf16.xpose.msra.mxu0 0
    %160 = vmatprep.mubr.bf16.mxu0 0
    %161 = vmatmul.mubr.bf16.gmra.mrb[0].mxu0 %v123
    %v162 = vpop.f32.mrb[0].mxu0
    %v163 = vadd.f32 %v37, %v162
    %v164 = vpop.f32.mrb[0].mxu0
    %v165 = vpop.f32.mrb[0].mxu0
    %v166 = vadd.f32 %v38, %v165
    %v167 = vpop.f32.mrb[0].mxu0
    %168 = vdwg.mxu0
    %vm169 = vcmask 130048
    %v170 = vsel %vm169, %v163, -inf
    %171 = vmax.xlane.f32.xlu0 %v170
    %v172 = vpop.xlane.xlu0 %171
    %v173 = vsel %vm169, %v166, -inf
    %174 = vmax.xlane.f32.xlu0 %v173
    %v175 = vpop.xlane.xlu0 %174
    %v176 = vsub.f32 %v163, %v172
    %v177 = vsub.f32 %v166, %v175
    %v178 = vmul.f32 %v176, 1.442695
    %v179 = vpow.pop %v178
    %v180 = vmul.f32 %v177, 1.442695
    %v181 = vpow.pop %v180
    %v182 = vsel %vm169, %v179, 0.0
    %183 = vadd.xlane.f32.xlu0 %v182
    %v184 = vpop.xlane.xlu0 %183
    %v185 = vsel %vm169, %v181, 0.0
    %186 = vadd.xlane.f32.xlu0 %v185
    %v187 = vpop.xlane.xlu0 %186
    %v188 = vrcp.pop %v184
    %v189 = vrcp.pop %v187
    %v190 = vmul.f32 %v184, %v188
    %v191 = vmul.f32 %v187, %v189
    %v192 = vsub.f32 2.0, %v190
    %v193 = vsub.f32 2.0, %v191
    %v194 = vmul.f32 %v188, %v192
    %v195 = vmul.f32 %v189, %v193
    %v196 = vmul.f32 %v179, %v194
    %v197 = vmul.f32 %v181, %v195
    %v198 = vpack.c.bf16 %v197, %v196
    %199 = vrot.lane.b32.xlu0 %v115, 32
    %v200 = vpop.permute.xlu0 %199
    %v203 = vsel %vm169, %v198, 0
    %205 = vmatprep.subr.bf16.mxu0 0
    %206 = vmatpush1.bf16.msra.mxu0 %v200
    %207 = vmatprep.subr.bf16.mxu0 0
    %208 = vmatpush1.bf16.msra.mxu0 0
    %209 = vmatprep.subr.bf16.mxu0 0
    %210 = vmatpush1.bf16.msra.mxu0 0
    %211 = vmatprep.subr.bf16.mxu0 0
    %212 = vmatpush1.bf16.msra.mxu0 0
    %213 = vmatprep.subr.bf16.mxu0 0
    %214 = vmatpush1.bf16.msra.mxu0 0
    %215 = vmatprep.subr.bf16.mxu0 0
    %216 = vmatpush1.bf16.msra.mxu0 0
    %217 = vmatprep.subr.bf16.mxu0 0
    %218 = vmatpush1.bf16.msra.mxu0 0
    %219 = vmatprep.subr.bf16.mxu0 0
    %220 = vmatpush1.bf16.msra.mxu0 0
    %221 = vmatprep.subr.bf16.mxu0 0
    %222 = vmatpush1.bf16.msra.mxu0 0
    %223 = vmatprep.subr.bf16.mxu0 0
    %224 = vmatpush1.bf16.msra.mxu0 0
    %225 = vmatprep.subr.bf16.mxu0 0
    %226 = vmatpush1.bf16.msra.mxu0 0
    %227 = vmatprep.subr.bf16.mxu0 0
    %228 = vmatpush1.bf16.msra.mxu0 0
    %229 = vmatprep.subr.bf16.mxu0 0
    %230 = vmatpush1.bf16.msra.mxu0 0
    %231 = vmatprep.subr.bf16.mxu0 0
    %232 = vmatpush1.bf16.msra.mxu0 0
    %233 = vmatprep.subr.bf16.mxu0 0
    %234 = vmatpush1.bf16.msra.mxu0 0
    %235 = vmatprep.subr.bf16.mxu0 0
    %236 = vmatpush1.bf16.msra.mxu0 0
    %237 = vmatprep.mubr.bf16.mxu0 0
    %238 = vmatmul.mubr.bf16.gmra.mrb[0].mxu0 %v203
    %v239 = vpop.f32.mrb[0].mxu0
    %v240 = vadd.f32 0.0, %v239
    %v241 = vpop.f32.mrb[0].mxu0
    %v242 = vpop.f32.mrb[0].mxu0
    %v243 = vadd.f32 0.0, %v242
    %v244 = vpop.f32.mrb[0].mxu0
    %245 = vdwg.mxu0
    %246 = vrot.lane.b32.xlu0 %v115, 88
    %v247 = vpop.permute.xlu0 %246
    %248 = vrot.lane.b32.xlu0 %v115, 56
    %v249 = vpop.permute.xlu0 %248
    %v251 = vsel %vm121, %v247, 0
    %v254 = vsel %vm121, %v249, 0
    %256 = vmatprep.subr.bf16.mxu0 0
    %257 = vmatpush1.bf16.xpose.msra.mxu0 %v254
    %258 = vmatprep.subr.bf16.mxu0 0
    %259 = vmatpush1.bf16.xpose.msra.mxu0 0
    %260 = vmatprep.subr.bf16.mxu0 0
    %261 = vmatpush1.bf16.xpose.msra.mxu0 0
    %262 = vmatprep.subr.bf16.mxu0 0
    %263 = vmatpush1.bf16.xpose.msra.mxu0 0
    %264 = vmatprep.subr.bf16.mxu0 0
    %265 = vmatpush1.bf16.xpose.msra.mxu0 0
    %266 = vmatprep.subr.bf16.mxu0 0
    %267 = vmatpush1.bf16.xpose.msra.mxu0 0
    %268 = vmatprep.subr.bf16.mxu0 0
    %269 = vmatpush1.bf16.xpose.msra.mxu0 0
    %270 = vmatprep.subr.bf16.mxu0 0
    %271 = vmatpush1.bf16.xpose.msra.mxu0 0
    %272 = vmatprep.subr.bf16.mxu0 0
    %273 = vmatpush1.bf16.xpose.msra.mxu0 0
    %274 = vmatprep.subr.bf16.mxu0 0
    %275 = vmatpush1.bf16.xpose.msra.mxu0 0
    %276 = vmatprep.subr.bf16.mxu0 0
    %277 = vmatpush1.bf16.xpose.msra.mxu0 0
    %278 = vmatprep.subr.bf16.mxu0 0
    %279 = vmatpush1.bf16.xpose.msra.mxu0 0
    %280 = vmatprep.subr.bf16.mxu0 0
    %281 = vmatpush1.bf16.xpose.msra.mxu0 0
    %282 = vmatprep.subr.bf16.mxu0 0
    %283 = vmatpush1.bf16.xpose.msra.mxu0 0
    %284 = vmatprep.subr.bf16.mxu0 0
    %285 = vmatpush1.bf16.xpose.msra.mxu0 0
    %286 = vmatprep.subr.bf16.mxu0 0
    %287 = vmatpush1.bf16.xpose.msra.mxu0 0
    %288 = vmatprep.mubr.bf16.mxu0 0
    %289 = vmatmul.mubr.bf16.gmra.mrb[0].mxu0 %v251
    %v290 = vpop.f32.mrb[0].mxu0
    %v291 = vadd.f32 %v37, %v290
    %v292 = vpop.f32.mrb[0].mxu0
    %v293 = vpop.f32.mrb[0].mxu0
    %v294 = vadd.f32 %v38, %v293
    %v295 = vpop.f32.mrb[0].mxu0
    %296 = vdwg.mxu0
    %v297 = vsel %vm169, %v291, -inf
    %298 = vmax.xlane.f32.xlu0 %v297
    %v299 = vpop.xlane.xlu0 %298
    %v300 = vsel %vm169, %v294, -inf
    %301 = vmax.xlane.f32.xlu0 %v300
    %v302 = vpop.xlane.xlu0 %301
    %v303 = vsub.f32 %v291, %v299
    %v304 = vsub.f32 %v294, %v302
    %v305 = vmul.f32 %v303, 1.442695
    %v306 = vpow.pop %v305
    %v307 = vmul.f32 %v304, 1.442695
    %v308 = vpow.pop %v307
    %v309 = vsel %vm169, %v306, 0.0
    %310 = vadd.xlane.f32.xlu0 %v309
    %v311 = vpop.xlane.xlu0 %310
    %v312 = vsel %vm169, %v308, 0.0
    %313 = vadd.xlane.f32.xlu0 %v312
    %v314 = vpop.xlane.xlu0 %313
    %v315 = vrcp.pop %v311
    %v316 = vrcp.pop %v314
    %v317 = vmul.f32 %v311, %v315
    %v318 = vmul.f32 %v314, %v316
    %v319 = vsub.f32 2.0, %v317
    %v320 = vsub.f32 2.0, %v318
    %v321 = vmul.f32 %v315, %v319
    %v322 = vmul.f32 %v316, %v320
    %v323 = vmul.f32 %v306, %v321
    %v324 = vmul.f32 %v308, %v322
    %v325 = vpack.c.bf16 %v324, %v323
    %326 = vrot.lane.b32.xlu0 %v115, 24
    %v327 = vpop.permute.xlu0 %326
    %v330 = vsel %vm169, %v325, 0
    %332 = vmatprep.subr.bf16.mxu0 0
    %333 = vmatpush1.bf16.msra.mxu0 %v327
    %334 = vmatprep.subr.bf16.mxu0 0
    %335 = vmatpush1.bf16.msra.mxu0 0
    %336 = vmatprep.subr.bf16.mxu0 0
    %337 = vmatpush1.bf16.msra.mxu0 0
    %338 = vmatprep.subr.bf16.mxu0 0
    %339 = vmatpush1.bf16.msra.mxu0 0
    %340 = vmatprep.subr.bf16.mxu0 0
    %341 = vmatpush1.bf16.msra.mxu0 0
    %342 = vmatprep.subr.bf16.mxu0 0
    %343 = vmatpush1.bf16.msra.mxu0 0
    %344 = vmatprep.subr.bf16.mxu0 0
    %345 = vmatpush1.bf16.msra.mxu0 0
    %346 = vmatprep.subr.bf16.mxu0 0
    %347 = vmatpush1.bf16.msra.mxu0 0
    %348 = vmatprep.subr.bf16.mxu0 0
    %349 = vmatpush1.bf16.msra.mxu0 0
    %350 = vmatprep.subr.bf16.mxu0 0
    %351 = vmatpush1.bf16.msra.mxu0 0
    %352 = vmatprep.subr.bf16.mxu0 0
    %353 = vmatpush1.bf16.msra.mxu0 0
    %354 = vmatprep.subr.bf16.mxu0 0
    %355 = vmatpush1.bf16.msra.mxu0 0
    %356 = vmatprep.subr.bf16.mxu0 0
    %357 = vmatpush1.bf16.msra.mxu0 0
    %358 = vmatprep.subr.bf16.mxu0 0
    %359 = vmatpush1.bf16.msra.mxu0 0
    %360 = vmatprep.subr.bf16.mxu0 0
    %361 = vmatpush1.bf16.msra.mxu0 0
    %362 = vmatprep.subr.bf16.mxu0 0
    %363 = vmatpush1.bf16.msra.mxu0 0
    %364 = vmatprep.mubr.bf16.mxu0 0
    %365 = vmatmul.mubr.bf16.gmra.mrb[0].mxu0 %v330
    %v366 = vpop.f32.mrb[0].mxu0
    %v367 = vadd.f32 0.0, %v366
    %v368 = vpop.f32.mrb[0].mxu0
    %v369 = vpop.f32.mrb[0].mxu0
    %v370 = vadd.f32 0.0, %v369
    %v371 = vpop.f32.mrb[0].mxu0
    %372 = vdwg.mxu0
    %373 = vrot.lane.b32.xlu0 %v115, 80
    %v374 = vpop.permute.xlu0 %373
    %375 = vrot.lane.b32.xlu0 %v115, 48
    %v376 = vpop.permute.xlu0 %375
    %v378 = vsel %vm121, %v374, 0
    %v381 = vsel %vm121, %v376, 0
    %383 = vmatprep.subr.bf16.mxu0 0
    %384 = vmatpush1.bf16.xpose.msra.mxu0 %v381
    %385 = vmatprep.subr.bf16.mxu0 0
    %386 = vmatpush1.bf16.xpose.msra.mxu0 0
    %387 = vmatprep.subr.bf16.mxu0 0
    %388 = vmatpush1.bf16.xpose.msra.mxu0 0
    %389 = vmatprep.subr.bf16.mxu0 0
    %390 = vmatpush1.bf16.xpose.msra.mxu0 0
    %391 = vmatprep.subr.bf16.mxu0 0
    %392 = vmatpush1.bf16.xpose.msra.mxu0 0
    %393 = vmatprep.subr.bf16.mxu0 0
    %394 = vmatpush1.bf16.xpose.msra.mxu0 0
    %395 = vmatprep.subr.bf16.mxu0 0
    %396 = vmatpush1.bf16.xpose.msra.mxu0 0
    %397 = vmatprep.subr.bf16.mxu0 0
    %398 = vmatpush1.bf16.xpose.msra.mxu0 0
    %399 = vmatprep.subr.bf16.mxu0 0
    %400 = vmatpush1.bf16.xpose.msra.mxu0 0
    %401 = vmatprep.subr.bf16.mxu0 0
    %402 = vmatpush1.bf16.xpose.msra.mxu0 0
    %403 = vmatprep.subr.bf16.mxu0 0
    %404 = vmatpush1.bf16.xpose.msra.mxu0 0
    %405 = vmatprep.subr.bf16.mxu0 0
    %406 = vmatpush1.bf16.xpose.msra.mxu0 0
    %407 = vmatprep.subr.bf16.mxu0 0
    %408 = vmatpush1.bf16.xpose.msra.mxu0 0
    %409 = vmatprep.subr.bf16.mxu0 0
    %410 = vmatpush1.bf16.xpose.msra.mxu0 0
    %411 = vmatprep.subr.bf16.mxu0 0
    %412 = vmatpush1.bf16.xpose.msra.mxu0 0
    %413 = vmatprep.subr.bf16.mxu0 0
    %414 = vmatpush1.bf16.xpose.msra.mxu0 0
    %415 = vmatprep.mubr.bf16.mxu0 0
    %416 = vmatmul.mubr.bf16.gmra.mrb[0].mxu0 %v378
    %v417 = vpop.f32.mrb[0].mxu0
    %v418 = vadd.f32 %v37, %v417
    %v419 = vpop.f32.mrb[0].mxu0
    %v420 = vpop.f32.mrb[0].mxu0
    %v421 = vadd.f32 %v38, %v420
    %v422 = vpop.f32.mrb[0].mxu0
    %423 = vdwg.mxu0
    %v424 = vsel %vm169, %v418, -inf
    %425 = vmax.xlane.f32.xlu0 %v424
    %v426 = vpop.xlane.xlu0 %425
    %v427 = vsel %vm169, %v421, -inf
    %428 = vmax.xlane.f32.xlu0 %v427
    %v429 = vpop.xlane.xlu0 %428
    %v430 = vsub.f32 %v418, %v426
    %v431 = vsub.f32 %v421, %v429
    %v432 = vmul.f32 %v430, 1.442695
    %v433 = vpow.pop %v432
    %v434 = vmul.f32 %v431, 1.442695
    %v435 = vpow.pop %v434
    %v436 = vsel %vm169, %v433, 0.0
    %437 = vadd.xlane.f32.xlu0 %v436
    %v438 = vpop.xlane.xlu0 %437
    %v439 = vsel %vm169, %v435, 0.0
    %440 = vadd.xlane.f32.xlu0 %v439
    %v441 = vpop.xlane.xlu0 %440
    %v442 = vrcp.pop %v438
    %v443 = vrcp.pop %v441
    %v444 = vmul.f32 %v438, %v442
    %v445 = vmul.f32 %v441, %v443
    %v446 = vsub.f32 2.0, %v444
    %v447 = vsub.f32 2.0, %v445
    %v448 = vmul.f32 %v442, %v446
    %v449 = vmul.f32 %v443, %v447
    %v450 = vmul.f32 %v433, %v448
    %v451 = vmul.f32 %v435, %v449
    %v452 = vpack.c.bf16 %v451, %v450
    %453 = vrot.lane.b32.xlu0 %v115, 16
    %v454 = vpop.permute.xlu0 %453
    %v457 = vsel %vm169, %v452, 0
    %459 = vmatprep.subr.bf16.mxu0 0
    %460 = vmatpush1.bf16.msra.mxu0 %v454
    %461 = vmatprep.subr.bf16.mxu0 0
    %462 = vmatpush1.bf16.msra.mxu0 0
    %463 = vmatprep.subr.bf16.mxu0 0
    %464 = vmatpush1.bf16.msra.mxu0 0
    %465 = vmatprep.subr.bf16.mxu0 0
    %466 = vmatpush1.bf16.msra.mxu0 0
    %467 = vmatprep.subr.bf16.mxu0 0
    %468 = vmatpush1.bf16.msra.mxu0 0
    %469 = vmatprep.subr.bf16.mxu0 0
    %470 = vmatpush1.bf16.msra.mxu0 0
    %471 = vmatprep.subr.bf16.mxu0 0
    %472 = vmatpush1.bf16.msra.mxu0 0
    %473 = vmatprep.subr.bf16.mxu0 0
    %474 = vmatpush1.bf16.msra.mxu0 0
    %475 = vmatprep.subr.bf16.mxu0 0
    %476 = vmatpush1.bf16.msra.mxu0 0
    %477 = vmatprep.subr.bf16.mxu0 0
    %478 = vmatpush1.bf16.msra.mxu0 0
    %479 = vmatprep.subr.bf16.mxu0 0
    %480 = vmatpush1.bf16.msra.mxu0 0
    %481 = vmatprep.subr.bf16.mxu0 0
    %482 = vmatpush1.bf16.msra.mxu0 0
    %483 = vmatprep.subr.bf16.mxu0 0
    %484 = vmatpush1.bf16.msra.mxu0 0
    %485 = vmatprep.subr.bf16.mxu0 0
    %486 = vmatpush1.bf16.msra.mxu0 0
    %487 = vmatprep.subr.bf16.mxu0 0
    %488 = vmatpush1.bf16.msra.mxu0 0
    %489 = vmatprep.subr.bf16.mxu0 0
    %490 = vmatpush1.bf16.msra.mxu0 0
    %491 = vmatprep.mubr.bf16.mxu0 0
    %492 = vmatmul.mubr.bf16.gmra.mrb[0].mxu0 %v457
    %v493 = vpop.f32.mrb[0].mxu0
    %v494 = vadd.f32 0.0, %v493
    %v495 = vpop.f32.mrb[0].mxu0
    %v496 = vpop.f32.mrb[0].mxu0
    %v497 = vadd.f32 0.0, %v496
    %v498 = vpop.f32.mrb[0].mxu0
    %499 = vdwg.mxu0
    %500 = vrot.lane.b32.xlu0 %v115, 72
    %v501 = vpop.permute.xlu0 %500
    %502 = vrot.lane.b32.xlu0 %v115, 40
    %v503 = vpop.permute.xlu0 %502
    %v505 = vsel %vm121, %v501, 0
    %v508 = vsel %vm121, %v503, 0
    %510 = vmatprep.subr.bf16.mxu0 0
    %511 = vmatpush1.bf16.xpose.msra.mxu0 %v508
    %512 = vmatprep.subr.bf16.mxu0 0
    %513 = vmatpush1.bf16.xpose.msra.mxu0 0
    %514 = vmatprep.subr.bf16.mxu0 0
    %515 = vmatpush1.bf16.xpose.msra.mxu0 0
    %516 = vmatprep.subr.bf16.mxu0 0
    %517 = vmatpush1.bf16.xpose.msra.mxu0 0
    %518 = vmatprep.subr.bf16.mxu0 0
    %519 = vmatpush1.bf16.xpose.msra.mxu0 0
    %520 = vmatprep.subr.bf16.mxu0 0
    %521 = vmatpush1.bf16.xpose.msra.mxu0 0
    %522 = vmatprep.subr.bf16.mxu0 0
    %523 = vmatpush1.bf16.xpose.msra.mxu0 0
    %524 = vmatprep.subr.bf16.mxu0 0
    %525 = vmatpush1.bf16.xpose.msra.mxu0 0
    %526 = vmatprep.subr.bf16.mxu0 0
    %527 = vmatpush1.bf16.xpose.msra.mxu0 0
    %528 = vmatprep.subr.bf16.mxu0 0
    %529 = vmatpush1.bf16.xpose.msra.mxu0 0
    %530 = vmatprep.subr.bf16.mxu0 0
    %531 = vmatpush1.bf16.xpose.msra.mxu0 0
    %532 = vmatprep.subr.bf16.mxu0 0
    %533 = vmatpush1.bf16.xpose.msra.mxu0 0
    %534 = vmatprep.subr.bf16.mxu0 0
    %535 = vmatpush1.bf16.xpose.msra.mxu0 0
    %536 = vmatprep.subr.bf16.mxu0 0
    %537 = vmatpush1.bf16.xpose.msra.mxu0 0
    %538 = vmatprep.subr.bf16.mxu0 0
    %539 = vmatpush1.bf16.xpose.msra.mxu0 0
    %540 = vmatprep.subr.bf16.mxu0 0
    %541 = vmatpush1.bf16.xpose.msra.mxu0 0
    %542 = vmatprep.mubr.bf16.mxu0 0
    %543 = vmatmul.mubr.bf16.gmra.mrb[0].mxu0 %v505
    %v544 = vpop.f32.mrb[0].mxu0
    %v545 = vadd.f32 %v37, %v544
    %v546 = vpop.f32.mrb[0].mxu0
    %v547 = vpop.f32.mrb[0].mxu0
    %v548 = vadd.f32 %v38, %v547
    %v549 = vpop.f32.mrb[0].mxu0
    %550 = vdwg.mxu0
    %v551 = vsel %vm169, %v545, -inf
    %552 = vmax.xlane.f32.xlu0 %v551
    %v553 = vpop.xlane.xlu0 %552
    %v554 = vsel %vm169, %v548, -inf
    %555 = vmax.xlane.f32.xlu0 %v554
    %v556 = vpop.xlane.xlu0 %555
    %v557 = vsub.f32 %v545, %v553
    %v558 = vsub.f32 %v548, %v556
    %v559 = vmul.f32 %v557, 1.442695
    %v560 = vpow.pop %v559
    %v561 = vmul.f32 %v558, 1.442695
    %v562 = vpow.pop %v561
    %v563 = vsel %vm169, %v560, 0.0
    %564 = vadd.xlane.f32.xlu0 %v563
    %v565 = vpop.xlane.xlu0 %564
    %v566 = vsel %vm169, %v562, 0.0
    %567 = vadd.xlane.f32.xlu0 %v566
    %v568 = vpop.xlane.xlu0 %567
    %v569 = vrcp.pop %v565
    %v570 = vrcp.pop %v568
    %v571 = vmul.f32 %v565, %v569
    %v572 = vmul.f32 %v568, %v570
    %v573 = vsub.f32 2.0, %v571
    %v574 = vsub.f32 2.0, %v572
    %v575 = vmul.f32 %v569, %v573
    %v576 = vmul.f32 %v570, %v574
    %v577 = vmul.f32 %v560, %v575
    %v578 = vmul.f32 %v562, %v576
    %v579 = vpack.c.bf16 %v578, %v577
    %580 = vrot.lane.b32.xlu0 %v115, 8
    %v581 = vpop.permute.xlu0 %580
    %v584 = vsel %vm169, %v579, 0
    %586 = vmatprep.subr.bf16.mxu0 0
    %587 = vmatpush1.bf16.msra.mxu0 %v581
    %588 = vmatprep.subr.bf16.mxu0 0
    %589 = vmatpush1.bf16.msra.mxu0 0
    %590 = vmatprep.subr.bf16.mxu0 0
    %591 = vmatpush1.bf16.msra.mxu0 0
    %592 = vmatprep.subr.bf16.mxu0 0
    %593 = vmatpush1.bf16.msra.mxu0 0
    %594 = vmatprep.subr.bf16.mxu0 0
    %595 = vmatpush1.bf16.msra.mxu0 0
    %596 = vmatprep.subr.bf16.mxu0 0
    %597 = vmatpush1.bf16.msra.mxu0 0
    %598 = vmatprep.subr.bf16.mxu0 0
    %599 = vmatpush1.bf16.msra.mxu0 0
    %600 = vmatprep.subr.bf16.mxu0 0
    %601 = vmatpush1.bf16.msra.mxu0 0
    %602 = vmatprep.subr.bf16.mxu0 0
    %603 = vmatpush1.bf16.msra.mxu0 0
    %604 = vmatprep.subr.bf16.mxu0 0
    %605 = vmatpush1.bf16.msra.mxu0 0
    %606 = vmatprep.subr.bf16.mxu0 0
    %607 = vmatpush1.bf16.msra.mxu0 0
    %608 = vmatprep.subr.bf16.mxu0 0
    %609 = vmatpush1.bf16.msra.mxu0 0
    %610 = vmatprep.subr.bf16.mxu0 0
    %611 = vmatpush1.bf16.msra.mxu0 0
    %612 = vmatprep.subr.bf16.mxu0 0
    %613 = vmatpush1.bf16.msra.mxu0 0
    %614 = vmatprep.subr.bf16.mxu0 0
    %615 = vmatpush1.bf16.msra.mxu0 0
    %616 = vmatprep.subr.bf16.mxu0 0
    %617 = vmatpush1.bf16.msra.mxu0 0
    %618 = vmatprep.mubr.bf16.mxu0 0
    %619 = vmatmul.mubr.bf16.gmra.mrb[0].mxu0 %v584
    %v620 = vpop.f32.mrb[0].mxu0
    %v621 = vadd.f32 0.0, %v620
    %v622 = vpop.f32.mrb[0].mxu0
    %v623 = vpop.f32.mrb[0].mxu0
    %v624 = vadd.f32 0.0, %v623
    %v625 = vpop.f32.mrb[0].mxu0
    %626 = vdwg.mxu0
    %629 = vrot.lane.b32.xlu0 %v367, 8
    %v630 = vpop.permute.xlu0 %629
    %631 = vrot.lane.b32.xlu0 %v370, 8
    %v632 = vpop.permute.xlu0 %631
    %637 = vrot.lane.b32.xlu0 %v494, 16
    %v638 = vpop.permute.xlu0 %637
    %639 = vrot.lane.b32.xlu0 %v497, 16
    %v640 = vpop.permute.xlu0 %639
    %645 = vrot.lane.b32.xlu0 %v621, 24
    %v646 = vpop.permute.xlu0 %645
    %647 = vrot.lane.b32.xlu0 %v624, 24
    %v648 = vpop.permute.xlu0 %647
    %v651 = vsel %vm121, %v240, %v630
    %v652 = vsel %vm121, %v243, %v632
    %v653 = vsel %vm169, %v651, %v638
    %v654 = vsel %vm169, %v652, %v640
    %vm655 = vcmask 195584
    %v656 = vsel %vm655, %v653, %v646
    %v657 = vsel %vm655, %v654, %v648
    %v658 = vpack.c.bf16 %v657, %v656
    %661 = vrot.lane.b32.xlu0 %v56, 64
    %v662 = vpop.permute.xlu0 %661
    %663 = vrot.lane.b32.xlu0 %v58, 64
    %v664 = vpop.permute.xlu0 %663
    %v668 = vsel %vm70, %v658, 0
    %670 = vmatprep.subr.bf16.mxu0 0
    %671 = vmatpush1.bf16.msra.mxu0 %v662
    %672 = vmatprep.subr.bf16.mxu0 0
    %673 = vmatpush1.bf16.msra.mxu0 %v664
    %674 = vmatprep.subr.bf16.mxu0 0
    %675 = vmatpush1.bf16.msra.mxu0 0
    %676 = vmatprep.subr.bf16.mxu0 0
    %677 = vmatpush1.bf16.msra.mxu0 0
    %678 = vmatprep.subr.bf16.mxu0 0
    %679 = vmatpush1.bf16.msra.mxu0 0
    %680 = vmatprep.subr.bf16.mxu0 0
    %681 = vmatpush1.bf16.msra.mxu0 0
    %682 = vmatprep.subr.bf16.mxu0 0
    %683 = vmatpush1.bf16.msra.mxu0 0
    %684 = vmatprep.subr.bf16.mxu0 0
    %685 = vmatpush1.bf16.msra.mxu0 0
    %686 = vmatprep.subr.bf16.mxu0 0
    %687 = vmatpush1.bf16.msra.mxu0 0
    %688 = vmatprep.subr.bf16.mxu0 0
    %689 = vmatpush1.bf16.msra.mxu0 0
    %690 = vmatprep.subr.bf16.mxu0 0
    %691 = vmatpush1.bf16.msra.mxu0 0
    %692 = vmatprep.subr.bf16.mxu0 0
    %693 = vmatpush1.bf16.msra.mxu0 0
    %694 = vmatprep.subr.bf16.mxu0 0
    %695 = vmatpush1.bf16.msra.mxu0 0
    %696 = vmatprep.subr.bf16.mxu0 0
    %697 = vmatpush1.bf16.msra.mxu0 0
    %698 = vmatprep.subr.bf16.mxu0 0
    %699 = vmatpush1.bf16.msra.mxu0 0
    %700 = vmatprep.subr.bf16.mxu0 0
    %701 = vmatpush1.bf16.msra.mxu0 0
    %702 = vmatprep.mubr.bf16.mxu0 0
    %703 = vmatmul.mubr.bf16.gmra.mrb[0].mxu0 %v668
    %v704 = vpop.f32.mrb[0].mxu0
    %v705 = vadd.f32 0.0, %v704
    %v706 = vpop.f32.mrb[0].mxu0
    %v707 = vpop.f32.mrb[0].mxu0
    %v708 = vadd.f32 0.0, %v707
    %v709 = vpop.f32.mrb[0].mxu0
    %710 = vdwg.mxu0
    %v712 = vsel %vm169, %v64, 0
    %714 = vmatprep.subr.bf16.mxu0 0
    %715 = vmatpush1.bf16.msra.mxu0 %v115
    %716 = vmatprep.subr.bf16.mxu0 0
    %717 = vmatpush1.bf16.msra.mxu0 0
    %718 = vmatprep.subr.bf16.mxu0 0
    %719 = vmatpush1.bf16.msra.mxu0 0
    %720 = vmatprep.subr.bf16.mxu0 0
    %721 = vmatpush1.bf16.msra.mxu0 0
    %722 = vmatprep.subr.bf16.mxu0 0
    %723 = vmatpush1.bf16.msra.mxu0 0
    %724 = vmatprep.subr.bf16.mxu0 0
    %725 = vmatpush1.bf16.msra.mxu0 0
    %726 = vmatprep.subr.bf16.mxu0 0
    %727 = vmatpush1.bf16.msra.mxu0 0
    %728 = vmatprep.subr.bf16.mxu0 0
    %729 = vmatpush1.bf16.msra.mxu0 0
    %730 = vmatprep.subr.bf16.mxu0 0
    %731 = vmatpush1.bf16.msra.mxu0 0
    %732 = vmatprep.subr.bf16.mxu0 0
    %733 = vmatpush1.bf16.msra.mxu0 0
    %734 = vmatprep.subr.bf16.mxu0 0
    %735 = vmatpush1.bf16.msra.mxu0 0
    %736 = vmatprep.subr.bf16.mxu0 0
    %737 = vmatpush1.bf16.msra.mxu0 0
    %738 = vmatprep.subr.bf16.mxu0 0
    %739 = vmatpush1.bf16.msra.mxu0 0
    %740 = vmatprep.subr.bf16.mxu0 0
    %741 = vmatpush1.bf16.msra.mxu0 0
    %742 = vmatprep.subr.bf16.mxu0 0
    %743 = vmatpush1.bf16.msra.mxu0 0
    %744 = vmatprep.subr.bf16.mxu0 0
    %745 = vmatpush1.bf16.msra.mxu0 0
    %746 = vmatprep.mubr.bf16.mxu0 0
    %747 = vmatmul.mubr.bf16.gmra.mrb[0].mxu0 %v712
    %v748 = vpop.f32.mrb[0].mxu0
    %v749 = vadd.f32 %v705, %v748
    %v750 = vpop.f32.mrb[0].mxu0
    %v751 = vpop.f32.mrb[0].mxu0
    %v752 = vadd.f32 %v708, %v751
    %v753 = vpop.f32.mrb[0].mxu0
    %754 = vdwg.mxu0
    %v755 = vmul.f32 %v33, 2.0
    %v756 = vmul.f32 %v34, 2.0
    %v757 = vadd.f32 %v749, %v755
    %v758 = vadd.f32 %v752, %v756
    %v759 = vlaneseq
    %v760 = vshrl.u32 %v759, 7
    %v761 = vsub.s32 1, %v760
    %v762 = vrot.slane %v63, %v761
    %v763 = vadd.f32 %v757, %v762
    %v764 = vadd.f32 %v758, %v762
    %v765 = vpack.c.bf16 %v764, %v763
    %v766 = vlaneseq
    %v767 = vshrl.u32 %v766, 7
    %v768 = vsub.s32 2, %v767
    %v769 = vrot.slane %v63, %v768
    %v771 = vsel %vm70, %v765, 0
    %773 = vmatprep.subr.bf16.mxu0 0
    %774 = vmatpush1.bf16.msra.mxu0 %v56
    %775 = vmatprep.subr.bf16.mxu0 0
    %776 = vmatpush1.bf16.msra.mxu0 %v58
    %777 = vmatprep.subr.bf16.mxu0 0
    %778 = vmatpush1.bf16.msra.mxu0 0
    %779 = vmatprep.subr.bf16.mxu0 0
    %780 = vmatpush1.bf16.msra.mxu0 0
    %781 = vmatprep.subr.bf16.mxu0 0
    %782 = vmatpush1.bf16.msra.mxu0 0
    %783 = vmatprep.subr.bf16.mxu0 0
    %784 = vmatpush1.bf16.msra.mxu0 0
    %785 = vmatprep.subr.bf16.mxu0 0
    %786 = vmatpush1.bf16.msra.mxu0 0
    %787 = vmatprep.subr.bf16.mxu0 0
    %788 = vmatpush1.bf16.msra.mxu0 0
    %789 = vmatprep.subr.bf16.mxu0 0
    %790 = vmatpush1.bf16.msra.mxu0 0
    %791 = vmatprep.subr.bf16.mxu0 0
    %792 = vmatpush1.bf16.msra.mxu0 0
    %793 = vmatprep.subr.bf16.mxu0 0
    %794 = vmatpush1.bf16.msra.mxu0 0
    %795 = vmatprep.subr.bf16.mxu0 0
    %796 = vmatpush1.bf16.msra.mxu0 0
    %797 = vmatprep.subr.bf16.mxu0 0
    %798 = vmatpush1.bf16.msra.mxu0 0
    %799 = vmatprep.subr.bf16.mxu0 0
    %800 = vmatpush1.bf16.msra.mxu0 0
    %801 = vmatprep.subr.bf16.mxu0 0
    %802 = vmatpush1.bf16.msra.mxu0 0
    %803 = vmatprep.subr.bf16.mxu0 0
    %804 = vmatpush1.bf16.msra.mxu0 0
    %805 = vmatprep.mubr.bf16.mxu0 0
    %806 = vmatmul.mubr.bf16.gmra.mrb[0].mxu0 %v771
    %v807 = vpop.f32.mrb[0].mxu0
    %v808 = vadd.f32 %v769, %v807
    %v809 = vpop.f32.mrb[0].mxu0
    %v810 = vpop.f32.mrb[0].mxu0
    %v811 = vadd.f32 %v769, %v810
    %v812 = vpop.f32.mrb[0].mxu0
    %813 = vdwg.mxu0
    %v814 = vmax.f32 %v808, 0.0
    %v815 = vmax.f32 %v811, 0.0
    %v816 = vpack.c.bf16 %v815, %v814
    %v817 = vlaneseq
    %v818 = vshrl.u32 %v817, 7
    %v819 = vsub.s32 3, %v818
    %v820 = vrot.slane %v63, %v819
    %vm821 = vcmask 523264
    %v823 = vsel %vm821, %v816, 0
    %825 = vmatprep.subr.bf16.mxu0 0
    %826 = vmatpush1.bf16.msra.mxu0 %v59
    %827 = vmatprep.subr.bf16.mxu0 0
    %828 = vmatpush1.bf16.msra.mxu0 %v60
    %829 = vmatprep.subr.bf16.mxu0 0
    %830 = vmatpush1.bf16.msra.mxu0 %v61
    %831 = vmatprep.subr.bf16.mxu0 0
    %832 = vmatpush1.bf16.msra.mxu0 %v62
    %833 = vmatprep.subr.bf16.mxu0 0
    %834 = vmatpush1.bf16.msra.mxu0 0
    %835 = vmatprep.subr.bf16.mxu0 0
    %836 = vmatpush1.bf16.msra.mxu0 0
    %837 = vmatprep.subr.bf16.mxu0 0
    %838 = vmatpush1.bf16.msra.mxu0 0
    %839 = vmatprep.subr.bf16.mxu0 0
    %840 = vmatpush1.bf16.msra.mxu0 0
    %841 = vmatprep.subr.bf16.mxu0 0
    %842 = vmatpush1.bf16.msra.mxu0 0
    %843 = vmatprep.subr.bf16.mxu0 0
    %844 = vmatpush1.bf16.msra.mxu0 0
    %845 = vmatprep.subr.bf16.mxu0 0
    %846 = vmatpush1.bf16.msra.mxu0 0
    %847 = vmatprep.subr.bf16.mxu0 0
    %848 = vmatpush1.bf16.msra.mxu0 0
    %849 = vmatprep.subr.bf16.mxu0 0
    %850 = vmatpush1.bf16.msra.mxu0 0
    %851 = vmatprep.subr.bf16.mxu0 0
    %852 = vmatpush1.bf16.msra.mxu0 0
    %853 = vmatprep.subr.bf16.mxu0 0
    %854 = vmatpush1.bf16.msra.mxu0 0
    %855 = vmatprep.subr.bf16.mxu0 0
    %856 = vmatpush1.bf16.msra.mxu0 0
    %857 = vmatprep.mubr.bf16.mxu0 0
    %858 = vmatmul.mubr.bf16.gmra.mrb[0].mxu0 %v823
    %v859 = vpop.f32.mrb[0].mxu0
    %v860 = vadd.f32 %v820, %v859
    %v861 = vpop.f32.mrb[0].mxu0
    %v862 = vpop.f32.mrb[0].mxu0
    %v863 = vadd.f32 %v820, %v862
    %v864 = vpop.f32.mrb[0].mxu0
    %865 = vdwg.mxu0
    %v866 = vadd.f32 %v860, %v33
    %v867 = vadd.f32 %v863, %v34
    %v868 = vsel %vm70, %v866, 0.0
    %v869 = vsel %vm70, %v867, 0.0
    %870 = vst [vmem:[#allocation5] sm:$0xff] %v868
    %871 = vst [vmem:[#allocation5 + $0x8] sm:$0xff] %v869
    // Predicated region
    $region22: #{tpu_custom_call.1} parent=1 // pred_check
      _
    $region23: #{tpu_custom_call.1} parent=1 // pred_check_branch
      %873 = sbr.rel (0) target = $region25
    $region24: #{tpu_custom_call.1} parent=1 // pred_region
      %s875 = ssub.s32 256, 256
      %876 = vsyncadd [#allocation4], %s875
      %s877 = sshll.u32 [#allocation5], 4
      %s878 = int_to_ptr.vmem [resolvable:$true] %s877
      %883 = dma.vmem_to_hbm [thread:$0]  %s878, 256, %s4, [#allocation4], 128, 128, 8
    $region25: #{tpu_custom_call.1} parent=1 // pred_fallthru
      _
    // Predicated region
    $region26: #{tpu_custom_call.1} parent=1 // pred_check
      _
    $region27: #{tpu_custom_call.1} parent=1 // pred_check_branch
      %885 = sbr.rel (0) target = $region29
    $region28: #{tpu_custom_call.1} parent=1 // pred_region
      %886 = dma.done [#allocation4], 256
    $region29: #{tpu_custom_call.1} parent=1 // pred_fallthru
      _
    %887 = vsyncpa [#allocation3], 1
    %888 = vsyncpa [#allocation4], 1

</llo_original>
